<compile_context>
chip_gen: v5e
topology: v5e:2x2
jax: 0.10.0
libtpu: 0.0.40
codegen_flags: <defaults>
</compile_context>

<pallas_src>
import jax
import jax.numpy as jnp
from jax.experimental import pallas as pl
from jax.experimental.pallas import tpu as pltpu

HIDDEN = 64        # logical hidden width (matches nn.Linear(n_obs, 64))
HP = 128           # padded hidden width (lane-dense)
AP = 128           # padded action width (lane-dense output)


def deep_qnet_kernel(x_ref, w1_ref, b1_ref, w2_ref, b2_ref, w3_ref, b3_ref, o_ref):
    # x tile: (TB, n_obs) f32 -> cast to bf16 for the MXU.
    x = x_ref[...].astype(jnp.bfloat16)

    # layer1 + tanh (f32 accumulate, f32 tanh)
    h1 = jnp.tanh(
        jnp.dot(x, w1_ref[...], preferred_element_type=jnp.float32) + b1_ref[...]
    )
    # layer2 + tanh
    h2 = jnp.tanh(
        jnp.dot(h1.astype(jnp.bfloat16), w2_ref[...],
                preferred_element_type=jnp.float32) + b2_ref[...]
    )
    # layer3 (no activation), lane-dense (TB, 128) store
    o_ref[...] = (
        jnp.dot(h2.astype(jnp.bfloat16), w3_ref[...],
                preferred_element_type=jnp.float32) + b3_ref[...]
    ).astype(o_ref.dtype)


def _pad2(a, shape, dtype):
    out = jnp.zeros(shape, dtype)
    return out.at[: a.shape[0], : a.shape[1]].set(a.astype(dtype))


def prepare_params(params):
    """Pad hidden/action dims to 128 lanes; weights -> bf16, biases -> f32.

    Zero padding is exact: tanh(0) = 0, and zero rows/cols contribute nothing
    to the downstream matmuls, so padded output columns are identically 0.
    """
    n_obs = params["w1"].shape[0]
    n_act = params["w3"].shape[1]
    return {
        "w1": _pad2(params["w1"], (n_obs, HP), jnp.bfloat16),
        "b1": _pad2(params["b1"], (1, HP), jnp.float32),
        "w2": _pad2(params["w2"], (HP, HP), jnp.bfloat16),
        "b2": _pad2(params["b2"], (1, HP), jnp.float32),
        "w3": _pad2(params["w3"], (HP, AP), jnp.bfloat16),
        "b3": _pad2(params["b3"], (1, AP), jnp.float32),
        "n_actions": n_act,
    }


def deep_qnet_forward(x, padded_params, *, tb=256):
    """x: (B, n_observations) f32. padded_params: output of prepare_params."""
    B, n_obs = x.shape
    n_actions = padded_params["n_actions"]

    # Batch tile: multiple of 8 sublanes, capped so VMEM stays tiny everywhere.
    TB = min(tb, max(8, ((B + 7) // 8) * 8))
    B_pad = pl.cdiv(B, TB) * TB
    if B_pad != B:
        x = jnp.zeros((B_pad, n_obs), x.dtype).at[:B].set(x)

    full = lambda a: pl.BlockSpec(a.shape, lambda i: (0, 0))
    w1, b1 = padded_params["w1"], padded_params["b1"]
    w2, b2 = padded_params["w2"], padded_params["b2"]
    w3, b3 = padded_params["w3"], padded_params["b3"]

    out = pl.pallas_call(
        deep_qnet_kernel,
        out_shape=jax.ShapeDtypeStruct((B_pad, AP), jnp.float32),
        grid=(B_pad // TB,),
        in_specs=[
            pl.BlockSpec((TB, n_obs), lambda i: (i, 0)),   # x: tiled over batch
            full(w1), full(b1),                            # weights/biases resident
            full(w2), full(b2),
            full(w3), full(b3),
        ],
        out_specs=pl.BlockSpec((TB, AP), lambda i: (i, 0)),
        compiler_params=pltpu.CompilerParams(
            dimension_semantics=("parallel",),
        ),
    )(x, w1, b1, w2, b2, w3, b3)

    return out[:B, :n_actions]


def init_params(key, n_observations, n_actions, hidden=HIDDEN):
    """Deterministic init mirroring nn.Linear (weights stored transposed, f32)."""
    ks = jax.random.split(key, 6)

    def linear(kw, kb, fan_in, fan_out):
        bound = 1.0 / jnp.sqrt(fan_in)
        # PyTorch Linear weight is (out, in); we store the transpose (in, out).
        w = jax.random.uniform(kw, (fan_in, fan_out), jnp.float32, -bound, bound)
        b = jax.random.uniform(kb, (1, fan_out), jnp.float32, -bound, bound)
        return w, b

    w1, b1 = linear(ks[0], ks[1], n_observations, hidden)
    w2, b2 = linear(ks[2], ks[3], hidden, hidden)
    w3, b3 = linear(ks[4], ks[5], hidden, n_actions)
    return {"w1": w1, "b1": b1, "w2": w2, "b2": b2, "w3": w3, "b3": b3}


if __name__ == "__main__":
    key = jax.random.PRNGKey(0)
    n_observations, n_actions, batch = 16, 8, 8

    k_x, k_p = jax.random.split(key)
    x = jax.random.normal(k_x, (batch, n_observations), jnp.float32)
    params = init_params(k_p, n_observations, n_actions)
    pparams = prepare_params(params)

    out = deep_qnet_forward(x, pparams)
    out = jax.block_until_ready(out)

    # Pure-JAX f32 reference (kernel uses bf16 MXU inputs -> loose tolerance).
    h1 = jnp.tanh(x @ params["w1"] + params["b1"])
    h2 = jnp.tanh(h1 @ params["w2"] + params["b2"])
    ref = h2 @ params["w3"] + params["b3"]
    assert out.shape == (batch, n_actions)
    assert jnp.allclose(out, ref, atol=5e-2), "mismatch vs f32 reference"

    # Tighter check against a bf16-emulated reference mirroring the kernel math.
    bf = jnp.bfloat16
    h1e = jnp.tanh(jnp.dot(x.astype(bf), pparams["w1"],
                           preferred_element_type=jnp.float32) + pparams["b1"])
    h2e = jnp.tanh(jnp.dot(h1e.astype(bf), pparams["w2"],
                           preferred_element_type=jnp.float32) + pparams["b2"])
    refe = (jnp.dot(h2e.astype(bf), pparams["w3"],
                    preferred_element_type=jnp.float32) + pparams["b3"])[:, :n_actions]
    assert jnp.allclose(out, refe, atol=1e-3), "mismatch vs bf16-emulated reference"

    print("KERNEL_OK")
</pallas_src>

<mosaic_0001>
module attributes {stable_mosaic.version = 11 : i64} {
  func.func @deep_qnet_kernel(%arg0: i32, %arg1: memref<8x16xf32, #tpu.memory_space<vmem>>, %arg2: memref<16x128xbf16, #tpu.memory_space<vmem>>, %arg3: memref<1x128xf32, #tpu.memory_space<vmem>>, %arg4: memref<128x128xbf16, #tpu.memory_space<vmem>>, %arg5: memref<1x128xf32, #tpu.memory_space<vmem>>, %arg6: memref<128x128xbf16, #tpu.memory_space<vmem>>, %arg7: memref<1x128xf32, #tpu.memory_space<vmem>>, %arg8: memref<8x128xf32, #tpu.memory_space<vmem>>) attributes {dimension_semantics = [#tpu.dimension_semantics<parallel>], iteration_bounds = array<i64: 1>, scalar_prefetch = 0 : i64, scratch_operands = 0 : i64, tpu.core_type = #tpu.core_type<tc>, window_params = [{transform_indices = @transform_0, window_bounds = array<i64: 8, 16>}, {pipeline_mode = #tpu.pipeline_mode<synchronous>, transform_indices = @transform_1, window_bounds = array<i64: 16, 128>}, {pipeline_mode = #tpu.pipeline_mode<synchronous>, transform_indices = @transform_2, window_bounds = array<i64: 1, 128>}, {pipeline_mode = #tpu.pipeline_mode<synchronous>, transform_indices = @transform_3, window_bounds = array<i64: 128, 128>}, {pipeline_mode = #tpu.pipeline_mode<synchronous>, transform_indices = @transform_4, window_bounds = array<i64: 1, 128>}, {pipeline_mode = #tpu.pipeline_mode<synchronous>, transform_indices = @transform_5, window_bounds = array<i64: 128, 128>}, {pipeline_mode = #tpu.pipeline_mode<synchronous>, transform_indices = @transform_6, window_bounds = array<i64: 1, 128>}, {transform_indices = @transform_7, window_bounds = array<i64: 8, 128>}]} {
    %c0 = arith.constant 0 : index
    %c0_0 = arith.constant 0 : index
    %0 = vector.load %arg1[%c0, %c0_0] : memref<8x16xf32, #tpu.memory_space<vmem>>, vector<8x16xf32>
    %1 = arith.truncf %0 : vector<8x16xf32> to vector<8x16xbf16>
    %c0_1 = arith.constant 0 : index
    %c0_2 = arith.constant 0 : index
    %2 = vector.load %arg2[%c0_1, %c0_2] : memref<16x128xbf16, #tpu.memory_space<vmem>>, vector<16x128xbf16>
    %cst = arith.constant dense<0.000000e+00> : vector<8x128xf32>
    %3 = tpu.matmul %1, %2, %cst {dimension_numbers = #tpu.dot_dimension_numbers<[1], [0], [0], [1], [0, 0, 1, 1], [], []>} : vector<8x16xbf16>, vector<16x128xbf16>, vector<8x128xf32> -> vector<8x128xf32>
    %c0_3 = arith.constant 0 : index
    %c0_4 = arith.constant 0 : index
    %4 = vector.load %arg3[%c0_3, %c0_4] : memref<1x128xf32, #tpu.memory_space<vmem>>, vector<1x128xf32>
    %5 = vector.broadcast %4 : vector<1x128xf32> to vector<8x128xf32>
    %6 = arith.addf %3, %5 : vector<8x128xf32>
    %7 = math.tanh %6 : vector<8x128xf32>
    %8 = arith.truncf %7 : vector<8x128xf32> to vector<8x128xbf16>
    %c0_5 = arith.constant 0 : index
    %c0_6 = arith.constant 0 : index
    %9 = vector.load %arg4[%c0_5, %c0_6] : memref<128x128xbf16, #tpu.memory_space<vmem>>, vector<128x128xbf16>
    %cst_7 = arith.constant dense<0.000000e+00> : vector<8x128xf32>
    %10 = tpu.matmul %8, %9, %cst_7 {dimension_numbers = #tpu.dot_dimension_numbers<[1], [0], [0], [1], [0, 0, 1, 1], [], []>} : vector<8x128xbf16>, vector<128x128xbf16>, vector<8x128xf32> -> vector<8x128xf32>
    %c0_8 = arith.constant 0 : index
    %c0_9 = arith.constant 0 : index
    %11 = vector.load %arg5[%c0_8, %c0_9] : memref<1x128xf32, #tpu.memory_space<vmem>>, vector<1x128xf32>
    %12 = vector.broadcast %11 : vector<1x128xf32> to vector<8x128xf32>
    %13 = arith.addf %10, %12 : vector<8x128xf32>
    %14 = math.tanh %13 : vector<8x128xf32>
    %15 = arith.truncf %14 : vector<8x128xf32> to vector<8x128xbf16>
    %c0_10 = arith.constant 0 : index
    %c0_11 = arith.constant 0 : index
    %16 = vector.load %arg6[%c0_10, %c0_11] : memref<128x128xbf16, #tpu.memory_space<vmem>>, vector<128x128xbf16>
    %cst_12 = arith.constant dense<0.000000e+00> : vector<8x128xf32>
    %17 = tpu.matmul %15, %16, %cst_12 {dimension_numbers = #tpu.dot_dimension_numbers<[1], [0], [0], [1], [0, 0, 1, 1], [], []>} : vector<8x128xbf16>, vector<128x128xbf16>, vector<8x128xf32> -> vector<8x128xf32>
    %c0_13 = arith.constant 0 : index
    %c0_14 = arith.constant 0 : index
    %18 = vector.load %arg7[%c0_13, %c0_14] : memref<1x128xf32, #tpu.memory_space<vmem>>, vector<1x128xf32>
    %19 = vector.broadcast %18 : vector<1x128xf32> to vector<8x128xf32>
    %20 = arith.addf %17, %19 : vector<8x128xf32>
    %c0_15 = arith.constant 0 : index
    %c0_16 = arith.constant 0 : index
    %21 = vector.load %arg8[%c0_15, %c0_16] : memref<8x128xf32, #tpu.memory_space<vmem>>, vector<8x128xf32>
    tpu.vector_store %arg8[%c0_15, %c0_16], %20 {strides = array<i32>} : memref<8x128xf32, #tpu.memory_space<vmem>>, vector<8x128xf32>,
    return
  }
  func.func @transform_0(%arg0: i32) -> (i32, i32) {
    %c0_i32 = arith.constant 0 : i32
    %c0_i32_0 = arith.constant 0 : i32
    return %arg0, %c0_i32 : i32, i32
  }
  func.func @transform_1(%arg0: i32) -> (i32, i32) {
    %c0_i32 = arith.constant 0 : i32
    %c0_i32_0 = arith.constant 0 : i32
    %c0_i32_1 = arith.constant 0 : i32
    return %c0_i32, %c0_i32_0 : i32, i32
  }
  func.func @transform_2(%arg0: i32) -> (i32, i32) {
    %c0_i32 = arith.constant 0 : i32
    %c0_i32_0 = arith.constant 0 : i32
    %c0_i32_1 = arith.constant 0 : i32
    return %c0_i32, %c0_i32_0 : i32, i32
  }
  func.func @transform_3(%arg0: i32) -> (i32, i32) {
    %c0_i32 = arith.constant 0 : i32
    %c0_i32_0 = arith.constant 0 : i32
    %c0_i32_1 = arith.constant 0 : i32
    return %c0_i32, %c0_i32_0 : i32, i32
  }
  func.func @transform_4(%arg0: i32) -> (i32, i32) {
    %c0_i32 = arith.constant 0 : i32
    %c0_i32_0 = arith.constant 0 : i32
    %c0_i32_1 = arith.constant 0 : i32
    return %c0_i32, %c0_i32_0 : i32, i32
  }
  func.func @transform_5(%arg0: i32) -> (i32, i32) {
    %c0_i32 = arith.constant 0 : i32
    %c0_i32_0 = arith.constant 0 : i32
    %c0_i32_1 = arith.constant 0 : i32
    return %c0_i32, %c0_i32_0 : i32, i32
  }
  func.func @transform_6(%arg0: i32) -> (i32, i32) {
    %c0_i32 = arith.constant 0 : i32
    %c0_i32_0 = arith.constant 0 : i32
    %c0_i32_1 = arith.constant 0 : i32
    return %c0_i32, %c0_i32_0 : i32, i32
  }
  func.func @transform_7(%arg0: i32) -> (i32, i32) {
    %c0_i32 = arith.constant 0 : i32
    %c0_i32_0 = arith.constant 0 : i32
    return %arg0, %c0_i32 : i32, i32
  }
}

</mosaic_0001>

<llo_original>
// kernel: tpu_custom_call.1
$region0: #{tpu_custom_call.1}
  #allocation0 [shape = 'u32[]', space=smem, size = 0x4, offset = 0x4, fixed_abs, tag = 'smem constant byte address 0x4 - core index']
  #allocation1 [shape = 'u32[72,128]{1,0:T(1,128)}', space=vmem, size = 0x9000, scoped, tag = 'internal scratch']
  %s0 = inlined_call_operand.hbm [shape: f32[8,16], index: 0, kind: input, shape index: {}]
  %s1 = inlined_call_operand.hbm [shape: bf16[16,128], index: 1, kind: input, shape index: {}]
  %s2 = inlined_call_operand.vmem [shape: f32[1,128], index: 2, kind: input, shape index: {}]
  %s3 = inlined_call_operand.hbm [shape: bf16[128,128], index: 3, kind: input, shape index: {}]
  %s4 = inlined_call_operand.vmem [shape: f32[1,128], index: 4, kind: input, shape index: {}]
  %s5 = inlined_call_operand.hbm [shape: bf16[128,128], index: 5, kind: input, shape index: {}]
  %s6 = inlined_call_operand.vmem [shape: f32[1,128], index: 6, kind: input, shape index: {}]
  %s7 = inlined_call_operand.hbm [shape: f32[8,128], index: 7, kind: output, shape index: {}]
  %s8 = sld [smem:[#allocation0]]
  $region54: #{tpu_custom_call.1} parent=0
    _
  %s10 = ssub.s32 1, %s8
  %s11 = scalar_select 0, %s10, %s8
  $region1: #{tpu_custom_call.1} parent=0
    #allocation2 [shape = 'u8[4096]{0}', space=vmem, size = 0x1000, scoped, tag = 'input window, operand 0, single buffered']
    #allocation3 [shape = 's32[1]{0}', space=sflag, size = 0x4, scoped, tag = 'scoped memory for tpu_custom_call.1']
    #allocation4 [shape = 's32[1]{0}', space=sflag, size = 0x4, scoped, tag = 'scoped memory for tpu_custom_call.1']
    #allocation5 [shape = 'u8[4096]{0}', space=vmem, size = 0x1000, scoped, tag = 'input window, operand 1, single buffered']
    #allocation6 [shape = 's32[1]{0}', space=sflag, size = 0x4, scoped, tag = 'scoped memory for tpu_custom_call.1']
    #allocation7 [shape = 'u8[32768]{0}', space=vmem, size = 0x8000, scoped, tag = 'input window, operand 3, single buffered']
    #allocation8 [shape = 'u8[32768]{0}', space=vmem, size = 0x8000, scoped, tag = 'input window, operand 5, single buffered']
    #allocation9 [shape = 's32[1]{0}', space=sflag, size = 0x4, scoped, tag = 'scoped memory for tpu_custom_call.1']
    #allocation10 [shape = 'u8[4096]{0}', space=vmem, size = 0x1000, scoped, tag = 'output window, operand 0, single buffered']
    %12 = vsyncpa [#allocation3], 0
    %13 = vsyncpa [#allocation6], 0
    %14 = vsyncpa [#allocation9], 0
    %15 = vsyncpa [#allocation4], 0
    // Predicated region
    $region2: #{tpu_custom_call.1} parent=1 // pred_check
      _
    $region3: #{tpu_custom_call.1} parent=1 // pred_check_branch
      %17 = sbr.rel (0) target = $region5
    $region4: #{tpu_custom_call.1} parent=1 // pred_region
      %19 = vsyncadd [#allocation3], 0
      %s21 = sshll.u32 %s0, 4
      %s22 = int_to_ptr.hbm [resolvable:$true] %s21
      %s23 = sshll.u32 [#allocation2], 4
      %s24 = int_to_ptr.vmem [resolvable:$true] %s23
      %26 = dma.hbm_to_vmem [thread:$0]  %s22, 128, %s24, [#allocation3]
    $region5: #{tpu_custom_call.1} parent=1 // pred_fallthru
      _
    // Predicated region
    $region6: #{tpu_custom_call.1} parent=1 // pred_check
      _
    $region7: #{tpu_custom_call.1} parent=1 // pred_check_branch
      %28 = sbr.rel (0) target = $region9
    $region8: #{tpu_custom_call.1} parent=1 // pred_region
      %30 = vsyncadd [#allocation6], 0
      %s31 = sshll.u32 %s1, 4
      %s32 = int_to_ptr.hbm [resolvable:$true] %s31
      %s33 = sshll.u32 [#allocation5], 4
      %s34 = int_to_ptr.vmem [resolvable:$true] %s33
      %39 = dma.hbm_to_vmem [thread:$0]  %s32, 128, %s34, [#allocation6], 64, 64, 4
    $region9: #{tpu_custom_call.1} parent=1 // pred_fallthru
      _
    // Predicated region
    $region10: #{tpu_custom_call.1} parent=1 // pred_check
      _
    $region11: #{tpu_custom_call.1} parent=1 // pred_check_branch
      %41 = sbr.rel (0) target = $region13
    $region12: #{tpu_custom_call.1} parent=1 // pred_region
      _
    $region13: #{tpu_custom_call.1} parent=1 // pred_fallthru
      _
    // Predicated region
    $region14: #{tpu_custom_call.1} parent=1 // pred_check
      _
    $region15: #{tpu_custom_call.1} parent=1 // pred_check_branch
      %43 = sbr.rel (0) target = $region17
    $region16: #{tpu_custom_call.1} parent=1 // pred_region
      %45 = vsyncadd [#allocation6], 0
      %s46 = sshll.u32 %s3, 4
      %s47 = int_to_ptr.hbm [resolvable:$true] %s46
      %s48 = sshll.u32 [#allocation7], 4
      %s49 = int_to_ptr.vmem [resolvable:$true] %s48
      %54 = dma.hbm_to_vmem [thread:$0]  %s47, 1024, %s49, [#allocation6], 64, 64, 4
    $region17: #{tpu_custom_call.1} parent=1 // pred_fallthru
      _
    // Predicated region
    $region18: #{tpu_custom_call.1} parent=1 // pred_check
      _
    $region19: #{tpu_custom_call.1} parent=1 // pred_check_branch
      %56 = sbr.rel (0) target = $region21
    $region20: #{tpu_custom_call.1} parent=1 // pred_region
      _
    $region21: #{tpu_custom_call.1} parent=1 // pred_fallthru
      _
    // Predicated region
    $region22: #{tpu_custom_call.1} parent=1 // pred_check
      _
    $region23: #{tpu_custom_call.1} parent=1 // pred_check_branch
      %58 = sbr.rel (0) target = $region25
    $region24: #{tpu_custom_call.1} parent=1 // pred_region
      %60 = vsyncadd [#allocation9], 0
      %s61 = sshll.u32 %s5, 4
      %s62 = int_to_ptr.hbm [resolvable:$true] %s61
      %s63 = sshll.u32 [#allocation8], 4
      %s64 = int_to_ptr.vmem [resolvable:$true] %s63
      %69 = dma.hbm_to_vmem [thread:$0]  %s62, 1024, %s64, [#allocation9], 64, 64, 4
    $region25: #{tpu_custom_call.1} parent=1 // pred_fallthru
      _
    // Predicated region
    $region26: #{tpu_custom_call.1} parent=1 // pred_check
      _
    $region27: #{tpu_custom_call.1} parent=1 // pred_check_branch
      %71 = sbr.rel (0) target = $region29
    $region28: #{tpu_custom_call.1} parent=1 // pred_region
      _
    $region29: #{tpu_custom_call.1} parent=1 // pred_fallthru
      _
    // Predicated region
    $region30: #{tpu_custom_call.1} parent=1 // pred_check
      _
    $region31: #{tpu_custom_call.1} parent=1 // pred_check_branch
      %73 = sbr.rel (0) target = $region33
    $region32: #{tpu_custom_call.1} parent=1 // pred_region
      %75 = dma.done [#allocation3], 128
    $region33: #{tpu_custom_call.1} parent=1 // pred_fallthru
      _
    // Predicated region
    $region34: #{tpu_custom_call.1} parent=1 // pred_check
      _
    $region35: #{tpu_custom_call.1} parent=1 // pred_check_branch
      %77 = sbr.rel (0) target = $region37
    $region36: #{tpu_custom_call.1} parent=1 // pred_region
      %79 = dma.done [#allocation6], 128
    $region37: #{tpu_custom_call.1} parent=1 // pred_fallthru
      _
    // Predicated region
    $region38: #{tpu_custom_call.1} parent=1 // pred_check
      _
    $region39: #{tpu_custom_call.1} parent=1 // pred_check_branch
      %81 = sbr.rel (0) target = $region41
    $region40: #{tpu_custom_call.1} parent=1 // pred_region
      %83 = dma.done [#allocation6], 1024
    $region41: #{tpu_custom_call.1} parent=1 // pred_fallthru
      _
    // Predicated region
    $region42: #{tpu_custom_call.1} parent=1 // pred_check
      _
    $region43: #{tpu_custom_call.1} parent=1 // pred_check_branch
      %85 = sbr.rel (0) target = $region45
    $region44: #{tpu_custom_call.1} parent=1 // pred_region
      %87 = dma.done [#allocation9], 1024
    $region45: #{tpu_custom_call.1} parent=1 // pred_fallthru
      _
    %v89 = vld [vmem:[#allocation2] sm:$0xff]
    %v90 = vpack.c.bf16 %v89, %v89
    %v91 = vld [vmem:[#allocation5] sm:$0xf]
    %v92 = vld [vmem:[#allocation5 + $0x4] sm:$0xf]
    %v93 = vld [vmem:[%s2] sm:$0x1]
    %v95 = vperm.slane %v93, 0
    %v99 = vunpack.c.l.b16 %v91
    %v100 = vunpack.c.l.b16 %v92
    %v101 = vpack.c.b16 %v100, %v99
    %vm103 = vcmask 130048
    %v105 = vsel %vm103, %v90, 0
    %107 = vmatpush.bf16.msra.mxu0 0
    %108 = vmatpush.bf16.msra.mxu0 0
    %109 = vmatpush.bf16.msra.mxu0 0
    %110 = vmatpush.bf16.msra.mxu0 0
    %111 = vmatpush.bf16.msra.mxu0 0
    %112 = vmatpush.bf16.msra.mxu0 0
    %113 = vmatpush.bf16.msra.mxu0 0
    %114 = vmatpush.bf16.msra.mxu0 %v101
    %115 = vmatmul.bf16.gmra.mxu0 %v105
    %v116 = vpop.f32.mrf.mxu0
    %v117 = vadd.f32 %v95, %v116
    %v118 = vpop.f32.mrf.mxu0
    %119 = vdwg.mxu0
    %v120 = vtanh.pop %v117
    %v121 = vpack.c.bf16 %v120, %v120
    %v122 = vld [vmem:[#allocation7] sm:$0xf]
    %v123 = vld [vmem:[#allocation7 + $0x4] sm:$0xf]
    %v124 = vld [vmem:[#allocation7 + $0x8] sm:$0xf]
    %v125 = vld [vmem:[#allocation7 + $0xc] sm:$0xf]
    %v126 = vld [vmem:[#allocation7 + $0x10] sm:$0xf]
    %v127 = vld [vmem:[#allocation7 + $0x14] sm:$0xf]
    %v128 = vld [vmem:[#allocation7 + $0x18] sm:$0xf]
    %v129 = vld [vmem:[#allocation7 + $0x1c] sm:$0xf]
    %v130 = vld [vmem:[#allocation7 + $0x20] sm:$0xf]
    %v131 = vld [vmem:[#allocation7 + $0x24] sm:$0xf]
    %v132 = vld [vmem:[#allocation7 + $0x28] sm:$0xf]
    %v133 = vld [vmem:[#allocation7 + $0x2c] sm:$0xf]
    %v134 = vld [vmem:[#allocation7 + $0x30] sm:$0xf]
    %v135 = vld [vmem:[#allocation7 + $0x34] sm:$0xf]
    %v136 = vld [vmem:[#allocation7 + $0x38] sm:$0xf]
    %v137 = vld [vmem:[#allocation7 + $0x3c] sm:$0xf]
    %v138 = vld [vmem:[%s4] sm:$0x1]
    %v140 = vperm.slane %v138, 0
    %v158 = vunpack.c.l.b16 %v122
    %v159 = vunpack.c.l.b16 %v123
    %v160 = vunpack.c.l.b16 %v124
    %v161 = vunpack.c.l.b16 %v125
    %v162 = vunpack.c.l.b16 %v126
    %v163 = vunpack.c.l.b16 %v127
    %v164 = vunpack.c.l.b16 %v128
    %v165 = vunpack.c.l.b16 %v129
    %v166 = vunpack.c.l.b16 %v130
    %v167 = vunpack.c.l.b16 %v131
    %v168 = vunpack.c.l.b16 %v132
    %v169 = vunpack.c.l.b16 %v133
    %v170 = vunpack.c.l.b16 %v134
    %v171 = vunpack.c.l.b16 %v135
    %v172 = vunpack.c.l.b16 %v136
    %v173 = vunpack.c.l.b16 %v137
    %v174 = vpack.c.b16 %v159, %v158
    %v175 = vpack.c.b16 %v161, %v160
    %v176 = vpack.c.b16 %v163, %v162
    %v177 = vpack.c.b16 %v165, %v164
    %v178 = vpack.c.b16 %v167, %v166
    %v179 = vpack.c.b16 %v169, %v168
    %v180 = vpack.c.b16 %v171, %v170
    %v181 = vpack.c.b16 %v173, %v172
    %190 = vmatpush.bf16.msra.mxu0 %v181
    %191 = vmatpush.bf16.msra.mxu0 %v180
    %192 = vmatpush.bf16.msra.mxu0 %v179
    %193 = vmatpush.bf16.msra.mxu0 %v178
    %194 = vmatpush.bf16.msra.mxu0 %v177
    %195 = vmatpush.bf16.msra.mxu0 %v176
    %196 = vmatpush.bf16.msra.mxu0 %v175
    %197 = vmatpush.bf16.msra.mxu0 %v174
    %198 = vmatmul.bf16.gmra.mxu0 %v121
    %v199 = vpop.f32.mrf.mxu0
    %v200 = vadd.f32 %v140, %v199
    %v201 = vpop.f32.mrf.mxu0
    %202 = vdwg.mxu0
    %v203 = vtanh.pop %v200
    %v204 = vpack.c.bf16 %v203, %v203
    %v205 = vld [vmem:[#allocation8] sm:$0xf]
    %v206 = vld [vmem:[#allocation8 + $0x4] sm:$0xf]
    %v207 = vld [vmem:[#allocation8 + $0x8] sm:$0xf]
    %v208 = vld [vmem:[#allocation8 + $0xc] sm:$0xf]
    %v209 = vld [vmem:[#allocation8 + $0x10] sm:$0xf]
    %v210 = vld [vmem:[#allocation8 + $0x14] sm:$0xf]
    %v211 = vld [vmem:[#allocation8 + $0x18] sm:$0xf]
    %v212 = vld [vmem:[#allocation8 + $0x1c] sm:$0xf]
    %v213 = vld [vmem:[#allocation8 + $0x20] sm:$0xf]
    %v214 = vld [vmem:[#allocation8 + $0x24] sm:$0xf]
    %v215 = vld [vmem:[#allocation8 + $0x28] sm:$0xf]
    %v216 = vld [vmem:[#allocation8 + $0x2c] sm:$0xf]
    %v217 = vld [vmem:[#allocation8 + $0x30] sm:$0xf]
    %v218 = vld [vmem:[#allocation8 + $0x34] sm:$0xf]
    %v219 = vld [vmem:[#allocation8 + $0x38] sm:$0xf]
    %v220 = vld [vmem:[#allocation8 + $0x3c] sm:$0xf]
    %v221 = vld [vmem:[%s6] sm:$0x1]
    %v223 = vperm.slane %v221, 0
    %v241 = vunpack.c.l.b16 %v205
    %v242 = vunpack.c.l.b16 %v206
    %v243 = vunpack.c.l.b16 %v207
    %v244 = vunpack.c.l.b16 %v208
    %v245 = vunpack.c.l.b16 %v209
    %v246 = vunpack.c.l.b16 %v210
    %v247 = vunpack.c.l.b16 %v211
    %v248 = vunpack.c.l.b16 %v212
    %v249 = vunpack.c.l.b16 %v213
    %v250 = vunpack.c.l.b16 %v214
    %v251 = vunpack.c.l.b16 %v215
    %v252 = vunpack.c.l.b16 %v216
    %v253 = vunpack.c.l.b16 %v217
    %v254 = vunpack.c.l.b16 %v218
    %v255 = vunpack.c.l.b16 %v219
    %v256 = vunpack.c.l.b16 %v220
    %v257 = vpack.c.b16 %v242, %v241
    %v258 = vpack.c.b16 %v244, %v243
    %v259 = vpack.c.b16 %v246, %v245
    %v260 = vpack.c.b16 %v248, %v247
    %v261 = vpack.c.b16 %v250, %v249
    %v262 = vpack.c.b16 %v252, %v251
    %v263 = vpack.c.b16 %v254, %v253
    %v264 = vpack.c.b16 %v256, %v255
    %273 = vmatpush.bf16.msra.mxu0 %v264
    %274 = vmatpush.bf16.msra.mxu0 %v263
    %275 = vmatpush.bf16.msra.mxu0 %v262
    %276 = vmatpush.bf16.msra.mxu0 %v261
    %277 = vmatpush.bf16.msra.mxu0 %v260
    %278 = vmatpush.bf16.msra.mxu0 %v259
    %279 = vmatpush.bf16.msra.mxu0 %v258
    %280 = vmatpush.bf16.msra.mxu0 %v257
    %281 = vmatmul.bf16.gmra.mxu0 %v204
    %v282 = vpop.f32.mrf.mxu0
    %v283 = vadd.f32 %v223, %v282
    %v284 = vpop.f32.mrf.mxu0
    %285 = vdwg.mxu0
    %286 = vst [vmem:[#allocation10] sm:$0xff] %v283
    // Predicated region
    $region46: #{tpu_custom_call.1} parent=1 // pred_check
      _
    $region47: #{tpu_custom_call.1} parent=1 // pred_check_branch
      %288 = sbr.rel (0) target = $region49
    $region48: #{tpu_custom_call.1} parent=1 // pred_region
      %290 = vsyncadd [#allocation4], 0
      %s292 = sshll.u32 [#allocation10], 4
      %s293 = int_to_ptr.vmem [resolvable:$true] %s292
      %s294 = sshll.u32 %s7, 4
      %s295 = int_to_ptr.hbm [resolvable:$true] %s294
      %297 = dma.vmem_to_hbm [thread:$0]  %s293, 128, %s295, [#allocation4]
    $region49: #{tpu_custom_call.1} parent=1 // pred_fallthru
      _
    // Predicated region
    $region50: #{tpu_custom_call.1} parent=1 // pred_check
      _
    $region51: #{tpu_custom_call.1} parent=1 // pred_check_branch
      %299 = sbr.rel (0) target = $region53
    $region52: #{tpu_custom_call.1} parent=1 // pred_region
      %301 = dma.done [#allocation4], 128
    $region53: #{tpu_custom_call.1} parent=1 // pred_fallthru
      _
    %302 = vsyncpa [#allocation3], 1
    %303 = vsyncpa [#allocation6], 1
    %304 = vsyncpa [#allocation9], 1
    %305 = vsyncpa [#allocation4], 1

</llo_original>
